<compile_context>
chip_gen: v5e
topology: v5e:2x2
jax: 0.10.0
libtpu: 0.0.40
codegen_flags: <defaults>
</compile_context>

<pallas_src>
import functools

import jax
import jax.numpy as jnp
from jax import lax
from jax.experimental import pallas as pl
from jax.experimental.pallas import tpu as pltpu

CRITIC_SIZE_HIDDEN = 64
CRITIC_NUM_HIDDEN = 3          # -> (CRITIC_NUM_HIDDEN - 1) = 2 extra hidden layers
NUM_PLAYERS = 2
IN_DIM = NUM_PLAYERS * 8 + 3   # 19
IN_DIM_PAD = 32                # zero-padded K for the first matmul (multiple of 8)
OUT_DIM = 1
TILE_B_MAX = 1024              # batch rows per grid step (multiple of 8; small VMEM use)


def _round_up(n, m):
    return ((n + m - 1) // m) * m


def _critic_kernel(num_hidden_layers, x_ref, w_in_ref, b_in_ref, *rest):
    """One batch tile of the MLP forward.

    rest = [w_h0, b_h0, ..., w_out, b_out, o_ref]
      x_ref : [TILE_B, IN_DIM_PAD] bf16
      w_*   : bf16 weights, [fan_in, fan_out]; w_out stored transposed as [1, H]
      b_*   : f32 biases, [1, fan_out]
      o_ref : [1, TILE_B] f32 (lane-dense output row for this tile)
    """
    hidden_refs = rest[: 2 * num_hidden_layers]
    w_out_ref = rest[2 * num_hidden_layers]
    b_out_ref = rest[2 * num_hidden_layers + 1]
    o_ref = rest[2 * num_hidden_layers + 2]

    # input layer + ReLU (bf16 MXU operands, f32 accumulation)
    y = jnp.dot(x_ref[...], w_in_ref[...], preferred_element_type=jnp.float32)
    y = jnp.maximum(y + b_in_ref[...], 0.0)

    # hidden layers + ReLU (static Python loop -> fully unrolled)
    for i in range(num_hidden_layers):
        w = hidden_refs[2 * i][...]
        b = hidden_refs[2 * i + 1][...]
        y = jnp.dot(y.astype(jnp.bfloat16), w, preferred_element_type=jnp.float32)
        y = jnp.maximum(y + b, 0.0)

    # output layer (no activation), produced lane-dense:
    #   out[0, j] = sum_k w_out[0, k] * y[j, k]  ->  [1, TILE_B] row
    out_row = lax.dot_general(
        w_out_ref[...], y.astype(jnp.bfloat16),
        dimension_numbers=(((1,), (1,)), ((), ())),
        preferred_element_type=jnp.float32)
    o_ref[...] = (out_row + b_out_ref[...]).astype(o_ref.dtype)


def critic_forward(x, params, *, tile_b_max=TILE_B_MAX):
    """x: [B, IN_DIM] float32. params: [W_in, b_in, W_h*, b_h*, W_out_row, b_out]."""
    B, d_in = x.shape
    k_pad, hidden = params[0].shape
    num_hidden_layers = (len(params) // 2) - 2  # exclude input & output layers

    tile_b = min(tile_b_max, _round_up(max(B, 8), 8))
    b_pad = _round_up(B, tile_b)
    num_tiles = b_pad // tile_b

    # bf16 + zero-pad: features 19 -> k_pad, batch B -> multiple of tile_b.
    x_p = jnp.pad(x.astype(jnp.bfloat16), ((0, b_pad - B), (0, k_pad - d_in)))

    in_specs = [pl.BlockSpec((tile_b, k_pad), lambda i: (i, 0))]
    for p in params:  # weights / biases stay resident (constant index map)
        in_specs.append(pl.BlockSpec(p.shape, lambda i: (0, 0)))

    flops = 2 * b_pad * (k_pad * hidden
                         + num_hidden_layers * hidden * hidden
                         + hidden * OUT_DIM)
    bytes_accessed = (int(x_p.size) * 2 + b_pad * 4
                      + sum(int(p.size) * p.dtype.itemsize for p in params))

    kernel = functools.partial(_critic_kernel, num_hidden_layers)
    out = pl.pallas_call(
        kernel,
        out_shape=jax.ShapeDtypeStruct((num_tiles, 1, tile_b), jnp.float32),
        grid=(num_tiles,),
        in_specs=in_specs,
        out_specs=pl.BlockSpec((None, 1, tile_b), lambda i: (i, 0, 0)),
        compiler_params=pltpu.CompilerParams(
            dimension_semantics=("parallel",)),
        cost_estimate=pl.CostEstimate(
            flops=flops, transcendentals=0, bytes_accessed=bytes_accessed),
    )(x_p, *params)

    # (num_tiles, 1, tile_b) is batch-contiguous -> [B, 1]
    return out.reshape(b_pad, 1)[:B]


def init_critic_params(key):
    """Init mimicking PyTorch nn.Linear default (U[-1/sqrt(fan_in), +1/sqrt(fan_in)]).

    Kernel-friendly storage:
      * weights are [fan_in, fan_out] (y = x @ W + b), cast to bf16
      * input-layer weight zero-padded along fan_in: 19 -> IN_DIM_PAD
      * output-layer weight stored transposed as a [1, HIDDEN] row (lane-dense output)
      * biases are f32, stored as [1, fan_out]
    """
    dims = [IN_DIM] + [CRITIC_SIZE_HIDDEN] * CRITIC_NUM_HIDDEN + [OUT_DIM]
    n_layers = len(dims) - 1
    params = []
    for li, (fan_in, fan_out) in enumerate(zip(dims[:-1], dims[1:])):
        key, kw, kb = jax.random.split(key, 3)
        bound = 1.0 / (fan_in ** 0.5)
        w = jax.random.uniform(kw, (fan_in, fan_out), jnp.float32, -bound, bound)
        b = jax.random.uniform(kb, (1, fan_out), jnp.float32, -bound, bound)
        if li == 0:
            w = jnp.pad(w, ((0, IN_DIM_PAD - fan_in), (0, 0)))
        if li == n_layers - 1:
            w = jnp.transpose(w)  # [1, HIDDEN]
        params += [w.astype(jnp.bfloat16), b]
    return params


def critic_forward_ref(x, params):
    """Pure-JAX reference of the same bf16-weight / f32-accumulate network."""
    w_in, b_in = params[0], params[1]
    hidden = params[2:-2]
    w_out, b_out = params[-2], params[-1]
    a = jnp.pad(x.astype(jnp.bfloat16), ((0, 0), (0, w_in.shape[0] - x.shape[1])))
    a = jnp.maximum(jnp.dot(a, w_in, preferred_element_type=jnp.float32) + b_in, 0.0)
    for i in range(len(hidden) // 2):
        w, b = hidden[2 * i], hidden[2 * i + 1]
        a = jnp.maximum(
            jnp.dot(a.astype(jnp.bfloat16), w, preferred_element_type=jnp.float32) + b,
            0.0)
    return jnp.dot(a.astype(jnp.bfloat16), jnp.transpose(w_out),
                   preferred_element_type=jnp.float32) + b_out


if __name__ == "__main__":
    key = jax.random.PRNGKey(0)
    key, kx1, kx2 = jax.random.split(key, 3)
    params = init_critic_params(key)

    # Small batch (single tile).
    B1 = 8
    x1 = jax.random.normal(kx1, (B1, IN_DIM), jnp.float32)
    out1 = jax.block_until_ready(critic_forward(x1, params))
    ref1 = critic_forward_ref(x1, params)
    assert out1.shape == (B1, OUT_DIM), out1.shape
    assert jnp.allclose(out1, ref1, atol=2e-3, rtol=2e-3), (out1, ref1)

    # Ragged batch with a small tile to exercise the multi-tile / padded path.
    B2 = 300
    x2 = jax.random.normal(kx2, (B2, IN_DIM), jnp.float32)
    out2 = jax.block_until_ready(critic_forward(x2, params, tile_b_max=128))
    ref2 = critic_forward_ref(x2, params)
    assert out2.shape == (B2, OUT_DIM), out2.shape
    assert jnp.allclose(out2, ref2, atol=2e-3, rtol=2e-3), (out2, ref2)

    print("KERNEL_OK")
</pallas_src>

<mosaic_0001>
module attributes {stable_mosaic.version = 11 : i64} {
  func.func @_critic_kernel(%arg0: i32, %arg1: memref<8x32xbf16, #tpu.memory_space<vmem>>, %arg2: memref<32x64xbf16, #tpu.memory_space<vmem>>, %arg3: memref<1x64xf32, #tpu.memory_space<vmem>>, %arg4: memref<64x64xbf16, #tpu.memory_space<vmem>>, %arg5: memref<1x64xf32, #tpu.memory_space<vmem>>, %arg6: memref<64x64xbf16, #tpu.memory_space<vmem>>, %arg7: memref<1x64xf32, #tpu.memory_space<vmem>>, %arg8: memref<1x64xbf16, #tpu.memory_space<vmem>>, %arg9: memref<1x1xf32, #tpu.memory_space<vmem>>, %arg10: memref<1x1x8xf32, #tpu.memory_space<vmem>>) attributes {dimension_semantics = [#tpu.dimension_semantics<parallel>], iteration_bounds = array<i64: 1>, scalar_prefetch = 0 : i64, scratch_operands = 0 : i64, tpu.core_type = #tpu.core_type<tc>, window_params = [{transform_indices = @transform_0, window_bounds = array<i64: 8, 32>}, {pipeline_mode = #tpu.pipeline_mode<synchronous>, transform_indices = @transform_1, window_bounds = array<i64: 32, 64>}, {pipeline_mode = #tpu.pipeline_mode<synchronous>, transform_indices = @transform_2, window_bounds = array<i64: 1, 64>}, {pipeline_mode = #tpu.pipeline_mode<synchronous>, transform_indices = @transform_3, window_bounds = array<i64: 64, 64>}, {pipeline_mode = #tpu.pipeline_mode<synchronous>, transform_indices = @transform_4, window_bounds = array<i64: 1, 64>}, {pipeline_mode = #tpu.pipeline_mode<synchronous>, transform_indices = @transform_5, window_bounds = array<i64: 64, 64>}, {pipeline_mode = #tpu.pipeline_mode<synchronous>, transform_indices = @transform_6, window_bounds = array<i64: 1, 64>}, {pipeline_mode = #tpu.pipeline_mode<synchronous>, transform_indices = @transform_7, window_bounds = array<i64: 1, 64>}, {pipeline_mode = #tpu.pipeline_mode<synchronous>, transform_indices = @transform_8, window_bounds = array<i64: 1, 1>}, {transform_indices = @transform_9, window_bounds = array<i64: 1, 1, 8>}]} {
    %c0 = arith.constant 0 : index
    %c0_0 = arith.constant 0 : index
    %0 = vector.load %arg1[%c0, %c0_0] : memref<8x32xbf16, #tpu.memory_space<vmem>>, vector<8x32xbf16>
    %c0_1 = arith.constant 0 : index
    %c0_2 = arith.constant 0 : index
    %1 = vector.load %arg2[%c0_1, %c0_2] : memref<32x64xbf16, #tpu.memory_space<vmem>>, vector<32x64xbf16>
    %cst = arith.constant dense<0.000000e+00> : vector<8x64xf32>
    %2 = tpu.matmul %0, %1, %cst {dimension_numbers = #tpu.dot_dimension_numbers<[1], [0], [0], [1], [0, 0, 1, 1], [], []>} : vector<8x32xbf16>, vector<32x64xbf16>, vector<8x64xf32> -> vector<8x64xf32>
    %c0_3 = arith.constant 0 : index
    %c0_4 = arith.constant 0 : index
    %3 = vector.load %arg3[%c0_3, %c0_4] : memref<1x64xf32, #tpu.memory_space<vmem>>, vector<1x64xf32>
    %4 = vector.broadcast %3 : vector<1x64xf32> to vector<8x64xf32>
    %5 = arith.addf %2, %4 : vector<8x64xf32>
    %cst_5 = arith.constant 0.000000e+00 : f32
    %6 = vector.broadcast %cst_5 : f32 to vector<8x64xf32>
    %7 = arith.maximumf %5, %6 : vector<8x64xf32>
    %c0_6 = arith.constant 0 : index
    %c0_7 = arith.constant 0 : index
    %8 = vector.load %arg4[%c0_6, %c0_7] : memref<64x64xbf16, #tpu.memory_space<vmem>>, vector<64x64xbf16>
    %c0_8 = arith.constant 0 : index
    %c0_9 = arith.constant 0 : index
    %9 = vector.load %arg5[%c0_8, %c0_9] : memref<1x64xf32, #tpu.memory_space<vmem>>, vector<1x64xf32>
    %10 = arith.truncf %7 : vector<8x64xf32> to vector<8x64xbf16>
    %cst_10 = arith.constant dense<0.000000e+00> : vector<8x64xf32>
    %11 = tpu.matmul %10, %8, %cst_10 {dimension_numbers = #tpu.dot_dimension_numbers<[1], [0], [0], [1], [0, 0, 1, 1], [], []>} : vector<8x64xbf16>, vector<64x64xbf16>, vector<8x64xf32> -> vector<8x64xf32>
    %12 = vector.broadcast %9 : vector<1x64xf32> to vector<8x64xf32>
    %13 = arith.addf %11, %12 : vector<8x64xf32>
    %cst_11 = arith.constant 0.000000e+00 : f32
    %14 = vector.broadcast %cst_11 : f32 to vector<8x64xf32>
    %15 = arith.maximumf %13, %14 : vector<8x64xf32>
    %c0_12 = arith.constant 0 : index
    %c0_13 = arith.constant 0 : index
    %16 = vector.load %arg6[%c0_12, %c0_13] : memref<64x64xbf16, #tpu.memory_space<vmem>>, vector<64x64xbf16>
    %c0_14 = arith.constant 0 : index
    %c0_15 = arith.constant 0 : index
    %17 = vector.load %arg7[%c0_14, %c0_15] : memref<1x64xf32, #tpu.memory_space<vmem>>, vector<1x64xf32>
    %18 = arith.truncf %15 : vector<8x64xf32> to vector<8x64xbf16>
    %cst_16 = arith.constant dense<0.000000e+00> : vector<8x64xf32>
    %19 = tpu.matmul %18, %16, %cst_16 {dimension_numbers = #tpu.dot_dimension_numbers<[1], [0], [0], [1], [0, 0, 1, 1], [], []>} : vector<8x64xbf16>, vector<64x64xbf16>, vector<8x64xf32> -> vector<8x64xf32>
    %20 = vector.broadcast %17 : vector<1x64xf32> to vector<8x64xf32>
    %21 = arith.addf %19, %20 : vector<8x64xf32>
    %cst_17 = arith.constant 0.000000e+00 : f32
    %22 = vector.broadcast %cst_17 : f32 to vector<8x64xf32>
    %23 = arith.maximumf %21, %22 : vector<8x64xf32>
    %c0_18 = arith.constant 0 : index
    %c0_19 = arith.constant 0 : index
    %24 = vector.load %arg8[%c0_18, %c0_19] : memref<1x64xbf16, #tpu.memory_space<vmem>>, vector<1x64xbf16>
    %25 = arith.truncf %23 : vector<8x64xf32> to vector<8x64xbf16>
    %cst_20 = arith.constant dense<0.000000e+00> : vector<1x8xf32>
    %26 = tpu.matmul %24, %25, %cst_20 {dimension_numbers = #tpu.dot_dimension_numbers<[1], [1], [0], [0], [0, 0, 1, 0], [], []>} : vector<1x64xbf16>, vector<8x64xbf16>, vector<1x8xf32> -> vector<1x8xf32>
    %c0_21 = arith.constant 0 : index
    %c0_22 = arith.constant 0 : index
    %27 = vector.load %arg9[%c0_21, %c0_22] : memref<1x1xf32, #tpu.memory_space<vmem>>, vector<1x1xf32>
    %28 = vector.broadcast %27 : vector<1x1xf32> to vector<1x8xf32>
    %29 = arith.addf %26, %28 : vector<1x8xf32>
    %c0_23 = arith.constant 0 : index
    %c0_24 = arith.constant 0 : index
    %c0_25 = arith.constant 0 : index
    %30 = vector.load %arg10[%c0_23, %c0_24, %c0_25] : memref<1x1x8xf32, #tpu.memory_space<vmem>>, vector<1x1x8xf32>
    %31 = vector.shape_cast %30 : vector<1x1x8xf32> to vector<1x8xf32>
    %32 = vector.shape_cast %29 : vector<1x8xf32> to vector<1x1x8xf32>
    tpu.vector_store %arg10[%c0_23, %c0_24, %c0_25], %32 {strides = array<i32>} : memref<1x1x8xf32, #tpu.memory_space<vmem>>, vector<1x1x8xf32>,
    return
  }
  func.func @transform_0(%arg0: i32) -> (i32, i32) {
    %c0_i32 = arith.constant 0 : i32
    %c0_i32_0 = arith.constant 0 : i32
    return %arg0, %c0_i32 : i32, i32
  }
  func.func @transform_1(%arg0: i32) -> (i32, i32) {
    %c0_i32 = arith.constant 0 : i32
    %c0_i32_0 = arith.constant 0 : i32
    %c0_i32_1 = arith.constant 0 : i32
    return %c0_i32, %c0_i32_0 : i32, i32
  }
  func.func @transform_2(%arg0: i32) -> (i32, i32) {
    %c0_i32 = arith.constant 0 : i32
    %c0_i32_0 = arith.constant 0 : i32
    %c0_i32_1 = arith.constant 0 : i32
    return %c0_i32, %c0_i32_0 : i32, i32
  }
  func.func @transform_3(%arg0: i32) -> (i32, i32) {
    %c0_i32 = arith.constant 0 : i32
    %c0_i32_0 = arith.constant 0 : i32
    %c0_i32_1 = arith.constant 0 : i32
    return %c0_i32, %c0_i32_0 : i32, i32
  }
  func.func @transform_4(%arg0: i32) -> (i32, i32) {
    %c0_i32 = arith.constant 0 : i32
    %c0_i32_0 = arith.constant 0 : i32
    %c0_i32_1 = arith.constant 0 : i32
    return %c0_i32, %c0_i32_0 : i32, i32
  }
  func.func @transform_5(%arg0: i32) -> (i32, i32) {
    %c0_i32 = arith.constant 0 : i32
    %c0_i32_0 = arith.constant 0 : i32
    %c0_i32_1 = arith.constant 0 : i32
    return %c0_i32, %c0_i32_0 : i32, i32
  }
  func.func @transform_6(%arg0: i32) -> (i32, i32) {
    %c0_i32 = arith.constant 0 : i32
    %c0_i32_0 = arith.constant 0 : i32
    %c0_i32_1 = arith.constant 0 : i32
    return %c0_i32, %c0_i32_0 : i32, i32
  }
  func.func @transform_7(%arg0: i32) -> (i32, i32) {
    %c0_i32 = arith.constant 0 : i32
    %c0_i32_0 = arith.constant 0 : i32
    %c0_i32_1 = arith.constant 0 : i32
    return %c0_i32, %c0_i32_0 : i32, i32
  }
  func.func @transform_8(%arg0: i32) -> (i32, i32) {
    %c0_i32 = arith.constant 0 : i32
    %c0_i32_0 = arith.constant 0 : i32
    %c0_i32_1 = arith.constant 0 : i32
    return %c0_i32, %c0_i32_0 : i32, i32
  }
  func.func @transform_9(%arg0: i32) -> (i32, i32, i32) {
    %c0_i32 = arith.constant 0 : i32
    %c0_i32_0 = arith.constant 0 : i32
    %c0_i32_1 = arith.constant 0 : i32
    return %arg0, %c0_i32, %c0_i32_0 : i32, i32, i32
  }
}

</mosaic_0001>

<llo_original>
// kernel: tpu_custom_call.1
$region0: #{tpu_custom_call.1}
  #allocation0 [shape = 'u32[]', space=smem, size = 0x4, offset = 0x4, fixed_abs, tag = 'smem constant byte address 0x4 - core index']
  #allocation1 [shape = 'u32[72,128]{1,0:T(1,128)}', space=vmem, size = 0x9000, scoped, tag = 'internal scratch']
  #allocation2 [shape = 'f32[1,1]{1,0:T(1,128)S(1)}', space=vmem, size = 0x200, scoped, tag = 'scoped memory for tpu_custom_call.1']
  %s0 = inlined_call_operand.hbm [shape: bf16[8,32], index: 0, kind: input, shape index: {}]
  %s1 = inlined_call_operand.hbm [shape: bf16[32,64], index: 1, kind: input, shape index: {}]
  %s2 = inlined_call_operand.vmem [shape: f32[1,64], index: 2, kind: input, shape index: {}]
  %s3 = inlined_call_operand.hbm [shape: bf16[64,64], index: 3, kind: input, shape index: {}]
  %s4 = inlined_call_operand.vmem [shape: f32[1,64], index: 4, kind: input, shape index: {}]
  %s5 = inlined_call_operand.hbm [shape: bf16[64,64], index: 5, kind: input, shape index: {}]
  %s6 = inlined_call_operand.vmem [shape: f32[1,64], index: 6, kind: input, shape index: {}]
  %s7 = inlined_call_operand.vmem [shape: bf16[1,64], index: 7, kind: input, shape index: {}]
  %s8 = inlined_call_operand.<no memory space> [shape: f32[1,1], index: 8, kind: input, shape index: {}]
  %s9 = inlined_call_operand.hbm [shape: f32[1,1,8], index: 9, kind: output, shape index: {}]
  %s10 = sld [smem:[#allocation0]]
  $region62: #{tpu_custom_call.1} parent=0
    _
  %s12 = ssub.s32 1, %s10
  %s13 = scalar_select 0, %s12, %s10
  %v14 = vstv %s8
  %15 = vst [vmem:[#allocation2] sm:$0x1] %v14
  $region1: #{tpu_custom_call.1} parent=0
    #allocation3 [shape = 'u8[2048]{0}', space=vmem, size = 0x800, scoped, tag = 'input window, operand 0, single buffered']
    #allocation4 [shape = 's32[1]{0}', space=sflag, size = 0x4, scoped, tag = 'scoped memory for tpu_custom_call.1']
    #allocation5 [shape = 's32[1]{0}', space=sflag, size = 0x4, scoped, tag = 'scoped memory for tpu_custom_call.1']
    #allocation6 [shape = 'u8[8192]{0}', space=vmem, size = 0x2000, scoped, tag = 'input window, operand 1, single buffered']
    #allocation7 [shape = 's32[1]{0}', space=sflag, size = 0x4, scoped, tag = 'scoped memory for tpu_custom_call.1']
    #allocation8 [shape = 'u8[16384]{0}', space=vmem, size = 0x4000, scoped, tag = 'input window, operand 3, single buffered']
    #allocation9 [shape = 'u8[16384]{0}', space=vmem, size = 0x4000, scoped, tag = 'input window, operand 5, single buffered']
    #allocation10 [shape = 's32[1]{0}', space=sflag, size = 0x4, scoped, tag = 'scoped memory for tpu_custom_call.1']
    #allocation11 [shape = 'u8[512]{0}', space=vmem, size = 0x400, scoped, tag = 'output window, operand 0, single buffered']
    %16 = vsyncpa [#allocation4], 0
    %17 = vsyncpa [#allocation7], 0
    %18 = vsyncpa [#allocation10], 0
    %19 = vsyncpa [#allocation5], 0
    // Predicated region
    $region2: #{tpu_custom_call.1} parent=1 // pred_check
      _
    $region3: #{tpu_custom_call.1} parent=1 // pred_check_branch
      %21 = sbr.rel (0) target = $region5
    $region4: #{tpu_custom_call.1} parent=1 // pred_region
      %23 = vsyncadd [#allocation4], 0
      %s25 = sshll.u32 %s0, 4
      %s26 = int_to_ptr.hbm [resolvable:$true] %s25
      %s27 = sshll.u32 [#allocation3], 4
      %s28 = int_to_ptr.vmem [resolvable:$true] %s27
      %30 = dma.hbm_to_vmem [thread:$0]  %s26, 64, %s28, [#allocation4]
    $region5: #{tpu_custom_call.1} parent=1 // pred_fallthru
      _
    // Predicated region
    $region6: #{tpu_custom_call.1} parent=1 // pred_check
      _
    $region7: #{tpu_custom_call.1} parent=1 // pred_check_branch
      %32 = sbr.rel (0) target = $region9
    $region8: #{tpu_custom_call.1} parent=1 // pred_region
      %34 = vsyncadd [#allocation7], 0
      %s35 = sshll.u32 %s1, 4
      %s36 = int_to_ptr.hbm [resolvable:$true] %s35
      %s37 = sshll.u32 [#allocation6], 4
      %s38 = int_to_ptr.vmem [resolvable:$true] %s37
      %43 = dma.hbm_to_vmem [thread:$0]  %s36, 256, %s38, [#allocation7], 64, 64, 4
    $region9: #{tpu_custom_call.1} parent=1 // pred_fallthru
      _
    // Predicated region
    $region10: #{tpu_custom_call.1} parent=1 // pred_check
      _
    $region11: #{tpu_custom_call.1} parent=1 // pred_check_branch
      %45 = sbr.rel (0) target = $region13
    $region12: #{tpu_custom_call.1} parent=1 // pred_region
      _
    $region13: #{tpu_custom_call.1} parent=1 // pred_fallthru
      _
    // Predicated region
    $region14: #{tpu_custom_call.1} parent=1 // pred_check
      _
    $region15: #{tpu_custom_call.1} parent=1 // pred_check_branch
      %47 = sbr.rel (0) target = $region17
    $region16: #{tpu_custom_call.1} parent=1 // pred_region
      %49 = vsyncadd [#allocation7], 0
      %s50 = sshll.u32 %s3, 4
      %s51 = int_to_ptr.hbm [resolvable:$true] %s50
      %s52 = sshll.u32 [#allocation8], 4
      %s53 = int_to_ptr.vmem [resolvable:$true] %s52
      %58 = dma.hbm_to_vmem [thread:$0]  %s51, 512, %s53, [#allocation7], 64, 64, 4
    $region17: #{tpu_custom_call.1} parent=1 // pred_fallthru
      _
    // Predicated region
    $region18: #{tpu_custom_call.1} parent=1 // pred_check
      _
    $region19: #{tpu_custom_call.1} parent=1 // pred_check_branch
      %60 = sbr.rel (0) target = $region21
    $region20: #{tpu_custom_call.1} parent=1 // pred_region
      _
    $region21: #{tpu_custom_call.1} parent=1 // pred_fallthru
      _
    // Predicated region
    $region22: #{tpu_custom_call.1} parent=1 // pred_check
      _
    $region23: #{tpu_custom_call.1} parent=1 // pred_check_branch
      %62 = sbr.rel (0) target = $region25
    $region24: #{tpu_custom_call.1} parent=1 // pred_region
      %64 = vsyncadd [#allocation10], 0
      %s65 = sshll.u32 %s5, 4
      %s66 = int_to_ptr.hbm [resolvable:$true] %s65
      %s67 = sshll.u32 [#allocation9], 4
      %s68 = int_to_ptr.vmem [resolvable:$true] %s67
      %73 = dma.hbm_to_vmem [thread:$0]  %s66, 512, %s68, [#allocation10], 64, 64, 4
    $region25: #{tpu_custom_call.1} parent=1 // pred_fallthru
      _
    // Predicated region
    $region26: #{tpu_custom_call.1} parent=1 // pred_check
      _
    $region27: #{tpu_custom_call.1} parent=1 // pred_check_branch
      %75 = sbr.rel (0) target = $region29
    $region28: #{tpu_custom_call.1} parent=1 // pred_region
      _
    $region29: #{tpu_custom_call.1} parent=1 // pred_fallthru
      _
    // Predicated region
    $region30: #{tpu_custom_call.1} parent=1 // pred_check
      _
    $region31: #{tpu_custom_call.1} parent=1 // pred_check_branch
      %77 = sbr.rel (0) target = $region33
    $region32: #{tpu_custom_call.1} parent=1 // pred_region
      _
    $region33: #{tpu_custom_call.1} parent=1 // pred_fallthru
      _
    // Predicated region
    $region34: #{tpu_custom_call.1} parent=1 // pred_check
      _
    $region35: #{tpu_custom_call.1} parent=1 // pred_check_branch
      %79 = sbr.rel (0) target = $region37
    $region36: #{tpu_custom_call.1} parent=1 // pred_region
      _
    $region37: #{tpu_custom_call.1} parent=1 // pred_fallthru
      _
    // Predicated region
    $region38: #{tpu_custom_call.1} parent=1 // pred_check
      _
    $region39: #{tpu_custom_call.1} parent=1 // pred_check_branch
      %81 = sbr.rel (0) target = $region41
    $region40: #{tpu_custom_call.1} parent=1 // pred_region
      %83 = dma.done [#allocation4], 64
    $region41: #{tpu_custom_call.1} parent=1 // pred_fallthru
      _
    // Predicated region
    $region42: #{tpu_custom_call.1} parent=1 // pred_check
      _
    $region43: #{tpu_custom_call.1} parent=1 // pred_check_branch
      %85 = sbr.rel (0) target = $region45
    $region44: #{tpu_custom_call.1} parent=1 // pred_region
      %87 = dma.done [#allocation7], 256
    $region45: #{tpu_custom_call.1} parent=1 // pred_fallthru
      _
    // Predicated region
    $region46: #{tpu_custom_call.1} parent=1 // pred_check
      _
    $region47: #{tpu_custom_call.1} parent=1 // pred_check_branch
      %89 = sbr.rel (0) target = $region49
    $region48: #{tpu_custom_call.1} parent=1 // pred_region
      %91 = dma.done [#allocation7], 512
    $region49: #{tpu_custom_call.1} parent=1 // pred_fallthru
      _
    // Predicated region
    $region50: #{tpu_custom_call.1} parent=1 // pred_check
      _
    $region51: #{tpu_custom_call.1} parent=1 // pred_check_branch
      %93 = sbr.rel (0) target = $region53
    $region52: #{tpu_custom_call.1} parent=1 // pred_region
      %95 = dma.done [#allocation10], 512
    $region53: #{tpu_custom_call.1} parent=1 // pred_fallthru
      _
    %v97 = vld [vmem:[#allocation3] sm:$0xf]
    %v98 = vld [vmem:[#allocation6] sm:$0xf]
    %v99 = vld [vmem:[#allocation6 + $0x4] sm:$0xf]
    %v100 = vld [vmem:[#allocation6 + $0x8] sm:$0xf]
    %v101 = vld [vmem:[#allocation6 + $0xc] sm:$0xf]
    %v102 = vld [vmem:[%s2] sm:$0x1]
    %v104 = vperm.slane %v102, 0
    %v110 = vunpack.c.l.b16 %v98
    %v111 = vunpack.c.l.b16 %v99
    %v112 = vunpack.c.l.b16 %v100
    %v113 = vunpack.c.l.b16 %v101
    %v114 = vpack.c.b16 %v111, %v110
    %v115 = vpack.c.b16 %v113, %v112
    %vm118 = vcmask 261120
    %v120 = vsel %vm118, %v97, 0
    %122 = vmatpush.bf16.msra.mxu0 0
    %123 = vmatpush.bf16.msra.mxu0 0
    %124 = vmatpush.bf16.msra.mxu0 0
    %125 = vmatpush.bf16.msra.mxu0 0
    %126 = vmatpush.bf16.msra.mxu0 0
    %127 = vmatpush.bf16.msra.mxu0 0
    %128 = vmatpush.bf16.msra.mxu0 %v115
    %129 = vmatpush.bf16.msra.mxu0 %v114
    %130 = vmatmul.bf16.gmra.mxu0 %v120
    %v131 = vpop.f32.mrf.mxu0
    %v132 = vadd.f32 %v104, %v131
    %v133 = vpop.f32.mrf.mxu0
    %134 = vdwg.mxu0
    %v135 = vmax.f32 %v132, 0.0
    %v136 = vld [vmem:[#allocation8] sm:$0xf]
    %v137 = vld [vmem:[#allocation8 + $0x4] sm:$0xf]
    %v138 = vld [vmem:[#allocation8 + $0x8] sm:$0xf]
    %v139 = vld [vmem:[#allocation8 + $0xc] sm:$0xf]
    %v140 = vld [vmem:[#allocation8 + $0x10] sm:$0xf]
    %v141 = vld [vmem:[#allocation8 + $0x14] sm:$0xf]
    %v142 = vld [vmem:[#allocation8 + $0x18] sm:$0xf]
    %v143 = vld [vmem:[#allocation8 + $0x1c] sm:$0xf]
    %v144 = vld [vmem:[%s4] sm:$0x1]
    %v145 = vpack.c.bf16 %v135, %v135
    %v147 = vperm.slane %v144, 0
    %v157 = vunpack.c.l.b16 %v136
    %v158 = vunpack.c.l.b16 %v137
    %v159 = vunpack.c.l.b16 %v138
    %v160 = vunpack.c.l.b16 %v139
    %v161 = vunpack.c.l.b16 %v140
    %v162 = vunpack.c.l.b16 %v141
    %v163 = vunpack.c.l.b16 %v142
    %v164 = vunpack.c.l.b16 %v143
    %v165 = vpack.c.b16 %v158, %v157
    %v166 = vpack.c.b16 %v160, %v159
    %v167 = vpack.c.b16 %v162, %v161
    %v168 = vpack.c.b16 %v164, %v163
    %vm173 = vcmask 523264
    %v175 = vsel %vm173, %v145, 0
    %177 = vmatpush.bf16.msra.mxu0 0
    %178 = vmatpush.bf16.msra.mxu0 0
    %179 = vmatpush.bf16.msra.mxu0 0
    %180 = vmatpush.bf16.msra.mxu0 0
    %181 = vmatpush.bf16.msra.mxu0 %v168
    %182 = vmatpush.bf16.msra.mxu0 %v167
    %183 = vmatpush.bf16.msra.mxu0 %v166
    %184 = vmatpush.bf16.msra.mxu0 %v165
    %185 = vmatmul.bf16.gmra.mxu0 %v175
    %v186 = vpop.f32.mrf.mxu0
    %v187 = vadd.f32 %v147, %v186
    %v188 = vpop.f32.mrf.mxu0
    %189 = vdwg.mxu0
    %v190 = vmax.f32 %v187, 0.0
    %v191 = vld [vmem:[#allocation9] sm:$0xf]
    %v192 = vld [vmem:[#allocation9 + $0x4] sm:$0xf]
    %v193 = vld [vmem:[#allocation9 + $0x8] sm:$0xf]
    %v194 = vld [vmem:[#allocation9 + $0xc] sm:$0xf]
    %v195 = vld [vmem:[#allocation9 + $0x10] sm:$0xf]
    %v196 = vld [vmem:[#allocation9 + $0x14] sm:$0xf]
    %v197 = vld [vmem:[#allocation9 + $0x18] sm:$0xf]
    %v198 = vld [vmem:[#allocation9 + $0x1c] sm:$0xf]
    %v199 = vld [vmem:[%s6] sm:$0x1]
    %v200 = vpack.c.bf16 %v190, %v190
    %v202 = vperm.slane %v199, 0
    %v212 = vunpack.c.l.b16 %v191
    %v213 = vunpack.c.l.b16 %v192
    %v214 = vunpack.c.l.b16 %v193
    %v215 = vunpack.c.l.b16 %v194
    %v216 = vunpack.c.l.b16 %v195
    %v217 = vunpack.c.l.b16 %v196
    %v218 = vunpack.c.l.b16 %v197
    %v219 = vunpack.c.l.b16 %v198
    %v220 = vpack.c.b16 %v213, %v212
    %v221 = vpack.c.b16 %v215, %v214
    %v222 = vpack.c.b16 %v217, %v216
    %v223 = vpack.c.b16 %v219, %v218
    %v229 = vsel %vm173, %v200, 0
    %231 = vmatpush.bf16.msra.mxu0 0
    %232 = vmatpush.bf16.msra.mxu0 0
    %233 = vmatpush.bf16.msra.mxu0 0
    %234 = vmatpush.bf16.msra.mxu0 0
    %235 = vmatpush.bf16.msra.mxu0 %v223
    %236 = vmatpush.bf16.msra.mxu0 %v222
    %237 = vmatpush.bf16.msra.mxu0 %v221
    %238 = vmatpush.bf16.msra.mxu0 %v220
    %239 = vmatmul.bf16.gmra.mxu0 %v229
    %v240 = vpop.f32.mrf.mxu0
    %v241 = vadd.f32 %v202, %v240
    %v242 = vpop.f32.mrf.mxu0
    %243 = vdwg.mxu0
    %v244 = vmax.f32 %v241, 0.0
    %v245 = vld [vmem:[%s7] sm:$0x1]
    %v246 = vpack.c.bf16 %v244, %v244
    %v247 = vld [vmem:[#allocation2] sm:$0x1]
    %249 = vset.pattern.permute.xlu0 0
    %250 = vperm.xlu0 %249, %v247
    %v251 = vpop.permute.xlu0 %250
    %v253 = vperm.slane %v251, 0
    %v255 = vsel %vm173, %v245, 0
    %v258 = vsel %vm173, %v246, 0
    %260 = vmatpush.bf16.xpose.msra.mxu0 0
    %261 = vmatpush.bf16.xpose.msra.mxu0 0
    %262 = vmatpush.bf16.xpose.msra.mxu0 0
    %263 = vmatpush.bf16.xpose.msra.mxu0 0
    %264 = vmatpush.bf16.xpose.msra.mxu0 0
    %265 = vmatpush.bf16.xpose.msra.mxu0 0
    %266 = vmatpush.bf16.xpose.msra.mxu0 0
    %267 = vmatpush.bf16.xpose.msra.mxu0 %v258
    %268 = vmatmul.bf16.gmra.mxu0 %v255
    %v269 = vpop.f32.mrf.mxu0
    %v270 = vadd.f32 %v253, %v269
    %v271 = vpop.f32.mrf.mxu0
    %272 = vdwg.mxu0
    %vm273 = vcmask 57344
    %274 = vst.msk [vmem:[#allocation11] sm:$0x1] %vm273, %v270
    // Predicated region
    $region54: #{tpu_custom_call.1} parent=1 // pred_check
      _
    $region55: #{tpu_custom_call.1} parent=1 // pred_check_branch
      %276 = sbr.rel (0) target = $region57
    $region56: #{tpu_custom_call.1} parent=1 // pred_region
      %278 = vsyncadd [#allocation5], 0
      %s280 = sshll.u32 [#allocation11], 4
      %s281 = int_to_ptr.vmem [resolvable:$true] %s280
      %s282 = sshll.u32 %s9, 4
      %s283 = int_to_ptr.hbm [resolvable:$true] %s282
      %285 = dma.vmem_to_hbm [thread:$0]  %s281, 16, %s283, [#allocation5]
    $region57: #{tpu_custom_call.1} parent=1 // pred_fallthru
      _
    // Predicated region
    $region58: #{tpu_custom_call.1} parent=1 // pred_check
      _
    $region59: #{tpu_custom_call.1} parent=1 // pred_check_branch
      %287 = sbr.rel (0) target = $region61
    $region60: #{tpu_custom_call.1} parent=1 // pred_region
      %289 = dma.done [#allocation5], 16
    $region61: #{tpu_custom_call.1} parent=1 // pred_fallthru
      _
    %290 = vsyncpa [#allocation4], 1
    %291 = vsyncpa [#allocation7], 1
    %292 = vsyncpa [#allocation10], 1
    %293 = vsyncpa [#allocation5], 1

</llo_original>
